<compile_context>
chip_gen: v7x
topology: tpu7x:2x2x1
jax: 0.10.0
libtpu: 0.0.40
codegen_flags: <defaults>
</compile_context>

<pallas_src>
import functools

import jax
import jax.numpy as jnp
from jax import lax
from jax.experimental import pallas as pl
from jax.experimental.pallas import tpu as pltpu  # noqa: F401 (TPU backend)


EPS = 1e-5  # PyTorch BatchNorm1d default


def _bn_relu(h, bn):
    """Training-mode BN (batch mean, biased var) + ReLU in scale/shift form.

    h:  (B, N) f32 activations.
    bn: (2, N) f32, rows = [gamma, beta].

    One fused sublane reduction produces sum(h) and sum(h*h) together; 1/B is
    folded into the scale/shift constants, leaving a single FMA + max on the
    (B, N) tile.  Variance via E[h^2]-mean^2 is fine at these activation
    scales (see correctness note in header for badly-centered inputs).
    """
    b_rows, n = h.shape
    inv_b = 1.0 / float(b_rows)
    stats = jnp.sum(jnp.concatenate([h, h * h], axis=-1),
                    axis=0, keepdims=True)            # (1, 2N) single XLU pass
    mean = stats[:, :n] * inv_b                       # (1, N)
    var = stats[:, n:] * inv_b - mean * mean          # biased variance
    gamma = bn[0:1, :]
    beta = bn[1:2, :]
    scale = gamma * lax.rsqrt(var + EPS)              # (1, N) row math (EUP)
    shift = beta - mean * scale                       # (1, N)
    return jnp.maximum(h * scale + shift, 0.0)        # one FMA per element


def featurizer_kernel(
    x_ref,    # (B, D)        f32  (cast to bf16 in-kernel)
    w1_ref,   # (D, D//2)     bf16
    bn1_ref,  # (2, D//2)     f32  rows: [gamma1, beta1]
    w2_ref,   # (D//2, base)  bf16
    bn2_ref,  # (2, base)     f32  rows: [gamma2, beta2]
    w3_ref,   # (base, Apad)  bf16 (lane-padded)
    b3_ref,   # (1, Apad)     f32  (lane-padded)
    out_ref,  # (B, Apad)     f32
):
    # Cast fused into the kernel: no separate XLA convert / extra HBM trip.
    x = x_ref[...].astype(jnp.bfloat16)

    # Fc_bn_ReLU(D -> D//2); Linear bias omitted (cancelled by training BN).
    h1 = jnp.dot(x, w1_ref[...], preferred_element_type=jnp.float32)
    h1 = _bn_relu(h1, bn1_ref[...]).astype(jnp.bfloat16)

    # Fc_bn_ReLU(D//2 -> base_dim); Linear bias omitted (cancelled by BN).
    h2 = jnp.dot(h1, w2_ref[...], preferred_element_type=jnp.float32)
    h2 = _bn_relu(h2, bn2_ref[...]).astype(jnp.bfloat16)

    # net_mean_alpha: Linear(base_dim -> alpha_dim), no BN / activation.
    out_ref[...] = (
        jnp.dot(h2, w3_ref[...], preferred_element_type=jnp.float32) + b3_ref[...]
    )


def pack_params(params):
    """One-time parameter packing (hoisted out of the per-call path).

    Returns (packed_tuple, alpha_dim).  b1/b2 are dropped — algebraically
    cancelled by the training-mode BN that follows each Linear.
    """
    (w1, b1, g1, be1, w2, b2, g2, be2, w3, b3) = params
    del b1, b2
    alpha_dim = w3.shape[1]
    alpha_pad = int(pl.cdiv(alpha_dim, 128)) * 128      # lane-dense output

    w1b = w1.astype(jnp.bfloat16)
    w2b = w2.astype(jnp.bfloat16)
    w3p = (
        jnp.zeros((w3.shape[0], alpha_pad), jnp.bfloat16)
        .at[:, :alpha_dim]
        .set(w3.astype(jnp.bfloat16))
    )
    b3p = jnp.zeros((1, alpha_pad), jnp.float32).at[:, :alpha_dim].set(b3)

    bn1 = jnp.concatenate([g1, be1], axis=0)            # (2, D//2)
    bn2 = jnp.concatenate([g2, be2], axis=0)            # (2, base_dim)

    packed = (w1b, bn1, w2b, bn2, w3p, b3p)
    return jax.tree_util.tree_map(jnp.asarray, packed), int(alpha_dim)


def _featurizer_padded(x_nchw, packed):
    """Single pallas_call; returns the lane-padded (B, Apad) output."""
    w1b, bn1, w2b, bn2, w3p, b3p = packed
    B = x_nchw.shape[0]
    D = w1b.shape[0]
    alpha_pad = w3p.shape[1]
    x_flat = x_nchw.reshape(B, D)                       # torch .view(B, -1); f32

    args = (x_flat, w1b, bn1, w2b, bn2, w3p, b3p)
    full = lambda a: pl.BlockSpec(a.shape, lambda: (0,) * a.ndim)

    return pl.pallas_call(
        featurizer_kernel,
        out_shape=jax.ShapeDtypeStruct((B, alpha_pad), jnp.float32),
        in_specs=[full(a) for a in args],
        out_specs=pl.BlockSpec((B, alpha_pad), lambda: (0, 0)),
    )(*args)


@functools.partial(jax.jit, static_argnames=("alpha_dim",))
def dense_featurizer_cmnist(x_nchw, packed, *, alpha_dim):
    """Jitted forward: reshape + kernel + fused narrowing slice, one executable."""
    out_pad = _featurizer_padded(x_nchw, packed)
    return out_pad[:, :alpha_dim]


def init_params(key, input_dim, base_dim, alpha_dim):
    """Deterministic synthetic weights matching the module's layer shapes.

    Weights stored as (in, out) so the kernel computes x @ W directly
    (transpose of PyTorch's (out, in) convention — numerically equivalent).
    b1/b2 are generated (PyTorch has them) but are dead under training-mode BN.
    """
    h1 = input_dim // 2
    ks = jax.random.split(key, 6)

    def lin(k, fan_in, fan_out):
        # PyTorch nn.Linear default init: U(-1/sqrt(fan_in), 1/sqrt(fan_in))
        bound = 1.0 / jnp.sqrt(fan_in)
        kw, kb = jax.random.split(k)
        w = jax.random.uniform(kw, (fan_in, fan_out), jnp.float32, -bound, bound)
        b = jax.random.uniform(kb, (1, fan_out), jnp.float32, -bound, bound)
        return w, b

    w1, b1 = lin(ks[0], input_dim, h1)
    w2, b2 = lin(ks[1], h1, base_dim)
    w3, b3 = lin(ks[2], base_dim, alpha_dim)
    # BN affine params: PyTorch default gamma=1, beta=0; perturb slightly but
    # deterministically so the BN path is actually exercised.
    g1 = 1.0 + 0.1 * jax.random.normal(ks[3], (1, h1), jnp.float32)
    be1 = 0.1 * jax.random.normal(ks[4], (1, h1), jnp.float32)
    g2 = 1.0 + 0.1 * jax.random.normal(ks[5], (1, base_dim), jnp.float32)
    be2 = jnp.zeros((1, base_dim), jnp.float32)
    return (w1, b1, g1, be1, w2, b2, g2, be2, w3, b3)


def reference(x_nchw, params):
    """Pure-JAX, full-f32, PyTorch-faithful reference (biases included)."""
    (w1, b1, g1, be1, w2, b2, g2, be2, w3, b3) = params
    B = x_nchw.shape[0]
    x = x_nchw.reshape(B, -1)

    def bn_relu(h, g, be):
        m = jnp.mean(h, axis=0, keepdims=True)
        v = jnp.mean((h - m) ** 2, axis=0, keepdims=True)
        return jnp.maximum(g * (h - m) / jnp.sqrt(v + EPS) + be, 0.0)

    h = bn_relu(x @ w1 + b1, g1, be1)
    h = bn_relu(h @ w2 + b2, g2, be2)
    return h @ w3 + b3


if __name__ == "__main__":
    # Small CMNIST-like shapes: (C, H, W) = (2, 16, 16) -> D = 512
    # input_dim = 512, D//2 = 256, base_dim = D//4 = 128,
    # latent_all_dim = 128, alpha_dim = int(128 * 0.5) = 64
    # Batch 16 = multiple of 16 so bf16 intermediates fill packed vregs.
    B, C, H, W = 16, 2, 16, 16
    D = C * H * W
    base_dim = D // 4
    alpha_dim = int((D // 4) * 0.5)

    key = jax.random.PRNGKey(0)
    kx, kp = jax.random.split(key)
    x = jax.random.normal(kx, (B, C, H, W), jnp.float32)
    params = init_params(kp, D, base_dim, alpha_dim)

    # One-time packing (cached across forward calls in real use).
    packed, a_dim = pack_params(params)

    out = jax.block_until_ready(
        dense_featurizer_cmnist(x, packed, alpha_dim=a_dim)
    )
    ref = reference(x, params)

    assert out.shape == (B, alpha_dim), out.shape
    # Tolerance accounts for bf16 matmul inputs (f32 accumulation) and noisy
    # small-batch BN stats; observed error ~1e-2 absolute.
    max_err = float(jnp.max(jnp.abs(out - ref)))
    assert jnp.allclose(out, ref, atol=5e-2, rtol=5e-2), max_err
    print("KERNEL_OK")
</pallas_src>

<mosaic_0001>
module attributes {stable_mosaic.version = 11 : i64} {
  func.func @featurizer_kernel(%arg0: memref<16x512xf32, #tpu.memory_space<vmem>>, %arg1: memref<512x256xbf16, #tpu.memory_space<vmem>>, %arg2: memref<2x256xf32, #tpu.memory_space<vmem>>, %arg3: memref<256x128xbf16, #tpu.memory_space<vmem>>, %arg4: memref<2x128xf32, #tpu.memory_space<vmem>>, %arg5: memref<128x128xbf16, #tpu.memory_space<vmem>>, %arg6: memref<1x128xf32, #tpu.memory_space<vmem>>, %arg7: memref<16x128xf32, #tpu.memory_space<vmem>>) attributes {dimension_semantics = [], scalar_prefetch = 0 : i64, scratch_operands = 0 : i64, tpu.core_type = #tpu.core_type<tc>} {
    %c0 = arith.constant 0 : index
    %c0_0 = arith.constant 0 : index
    %0 = vector.load %arg0[%c0, %c0_0] : memref<16x512xf32, #tpu.memory_space<vmem>>, vector<16x512xf32>
    %1 = arith.truncf %0 : vector<16x512xf32> to vector<16x512xbf16>
    %c0_1 = arith.constant 0 : index
    %c0_2 = arith.constant 0 : index
    %2 = vector.load %arg1[%c0_1, %c0_2] : memref<512x256xbf16, #tpu.memory_space<vmem>>, vector<512x256xbf16>
    %cst = arith.constant dense<0.000000e+00> : vector<16x256xf32>
    %3 = tpu.matmul %1, %2, %cst {dimension_numbers = #tpu.dot_dimension_numbers<[1], [0], [0], [1], [0, 0, 1, 1], [], []>} : vector<16x512xbf16>, vector<512x256xbf16>, vector<16x256xf32> -> vector<16x256xf32>
    %c0_3 = arith.constant 0 : index
    %c0_4 = arith.constant 0 : index
    %4 = vector.load %arg2[%c0_3, %c0_4] : memref<2x256xf32, #tpu.memory_space<vmem>>, vector<2x256xf32>
    %5 = arith.mulf %3, %3 : vector<16x256xf32>
    %6 = tpu.concatenate %3, %5 in 1 : vector<16x256xf32>, vector<16x256xf32> -> vector<16x512xf32>
    %cst_5 = arith.constant dense<0.000000e+00> : vector<512xf32>
    %7 = vector.multi_reduction <add>, %6, %cst_5 [0] : vector<16x512xf32> to vector<512xf32>
    %8 = vector.shape_cast %7 : vector<512xf32> to vector<1x512xf32>
    %9 = vector.extract_strided_slice %8 {offsets = [0, 0], sizes = [1, 256], strides = [1, 1]} : vector<1x512xf32> to vector<1x256xf32>
    %cst_6 = arith.constant 6.250000e-02 : f32
    %10 = vector.broadcast %cst_6 : f32 to vector<1x256xf32>
    %11 = arith.mulf %9, %10 : vector<1x256xf32>
    %12 = vector.extract_strided_slice %8 {offsets = [0, 256], sizes = [1, 256], strides = [1, 1]} : vector<1x512xf32> to vector<1x256xf32>
    %cst_7 = arith.constant 6.250000e-02 : f32
    %13 = vector.broadcast %cst_7 : f32 to vector<1x256xf32>
    %14 = arith.mulf %12, %13 : vector<1x256xf32>
    %15 = arith.mulf %11, %11 : vector<1x256xf32>
    %16 = arith.subf %14, %15 : vector<1x256xf32>
    %17 = vector.extract_strided_slice %4 {offsets = [0, 0], sizes = [1, 256], strides = [1, 1]} : vector<2x256xf32> to vector<1x256xf32>
    %18 = vector.extract_strided_slice %4 {offsets = [1, 0], sizes = [1, 256], strides = [1, 1]} : vector<2x256xf32> to vector<1x256xf32>
    %cst_8 = arith.constant 9.99999974E-6 : f32
    %19 = vector.broadcast %cst_8 : f32 to vector<1x256xf32>
    %20 = arith.addf %16, %19 : vector<1x256xf32>
    %21 = math.rsqrt %20 : vector<1x256xf32>
    %22 = arith.mulf %17, %21 : vector<1x256xf32>
    %23 = arith.mulf %11, %22 : vector<1x256xf32>
    %24 = arith.subf %18, %23 : vector<1x256xf32>
    %25 = vector.broadcast %22 : vector<1x256xf32> to vector<16x256xf32>
    %26 = arith.mulf %3, %25 : vector<16x256xf32>
    %27 = vector.broadcast %24 : vector<1x256xf32> to vector<16x256xf32>
    %28 = arith.addf %26, %27 : vector<16x256xf32>
    %cst_9 = arith.constant 0.000000e+00 : f32
    %29 = vector.broadcast %cst_9 : f32 to vector<16x256xf32>
    %30 = arith.maximumf %28, %29 : vector<16x256xf32>
    %31 = arith.truncf %30 : vector<16x256xf32> to vector<16x256xbf16>
    %c0_10 = arith.constant 0 : index
    %c0_11 = arith.constant 0 : index
    %32 = vector.load %arg3[%c0_10, %c0_11] : memref<256x128xbf16, #tpu.memory_space<vmem>>, vector<256x128xbf16>
    %cst_12 = arith.constant dense<0.000000e+00> : vector<16x128xf32>
    %33 = tpu.matmul %31, %32, %cst_12 {dimension_numbers = #tpu.dot_dimension_numbers<[1], [0], [0], [1], [0, 0, 1, 1], [], []>} : vector<16x256xbf16>, vector<256x128xbf16>, vector<16x128xf32> -> vector<16x128xf32>
    %c0_13 = arith.constant 0 : index
    %c0_14 = arith.constant 0 : index
    %34 = vector.load %arg4[%c0_13, %c0_14] : memref<2x128xf32, #tpu.memory_space<vmem>>, vector<2x128xf32>
    %35 = arith.mulf %33, %33 : vector<16x128xf32>
    %36 = tpu.concatenate %33, %35 in 1 : vector<16x128xf32>, vector<16x128xf32> -> vector<16x256xf32>
    %cst_15 = arith.constant dense<0.000000e+00> : vector<256xf32>
    %37 = vector.multi_reduction <add>, %36, %cst_15 [0] : vector<16x256xf32> to vector<256xf32>
    %38 = vector.shape_cast %37 : vector<256xf32> to vector<1x256xf32>
    %39 = vector.extract_strided_slice %38 {offsets = [0, 0], sizes = [1, 128], strides = [1, 1]} : vector<1x256xf32> to vector<1x128xf32>
    %cst_16 = arith.constant 6.250000e-02 : f32
    %40 = vector.broadcast %cst_16 : f32 to vector<1x128xf32>
    %41 = arith.mulf %39, %40 : vector<1x128xf32>
    %42 = vector.extract_strided_slice %38 {offsets = [0, 128], sizes = [1, 128], strides = [1, 1]} : vector<1x256xf32> to vector<1x128xf32>
    %cst_17 = arith.constant 6.250000e-02 : f32
    %43 = vector.broadcast %cst_17 : f32 to vector<1x128xf32>
    %44 = arith.mulf %42, %43 : vector<1x128xf32>
    %45 = arith.mulf %41, %41 : vector<1x128xf32>
    %46 = arith.subf %44, %45 : vector<1x128xf32>
    %47 = vector.extract_strided_slice %34 {offsets = [0, 0], sizes = [1, 128], strides = [1, 1]} : vector<2x128xf32> to vector<1x128xf32>
    %48 = vector.extract_strided_slice %34 {offsets = [1, 0], sizes = [1, 128], strides = [1, 1]} : vector<2x128xf32> to vector<1x128xf32>
    %cst_18 = arith.constant 9.99999974E-6 : f32
    %49 = vector.broadcast %cst_18 : f32 to vector<1x128xf32>
    %50 = arith.addf %46, %49 : vector<1x128xf32>
    %51 = math.rsqrt %50 : vector<1x128xf32>
    %52 = arith.mulf %47, %51 : vector<1x128xf32>
    %53 = arith.mulf %41, %52 : vector<1x128xf32>
    %54 = arith.subf %48, %53 : vector<1x128xf32>
    %55 = vector.broadcast %52 : vector<1x128xf32> to vector<16x128xf32>
    %56 = arith.mulf %33, %55 : vector<16x128xf32>
    %57 = vector.broadcast %54 : vector<1x128xf32> to vector<16x128xf32>
    %58 = arith.addf %56, %57 : vector<16x128xf32>
    %cst_19 = arith.constant 0.000000e+00 : f32
    %59 = vector.broadcast %cst_19 : f32 to vector<16x128xf32>
    %60 = arith.maximumf %58, %59 : vector<16x128xf32>
    %61 = arith.truncf %60 : vector<16x128xf32> to vector<16x128xbf16>
    %c0_20 = arith.constant 0 : index
    %c0_21 = arith.constant 0 : index
    %62 = vector.load %arg5[%c0_20, %c0_21] : memref<128x128xbf16, #tpu.memory_space<vmem>>, vector<128x128xbf16>
    %cst_22 = arith.constant dense<0.000000e+00> : vector<16x128xf32>
    %63 = tpu.matmul %61, %62, %cst_22 {dimension_numbers = #tpu.dot_dimension_numbers<[1], [0], [0], [1], [0, 0, 1, 1], [], []>} : vector<16x128xbf16>, vector<128x128xbf16>, vector<16x128xf32> -> vector<16x128xf32>
    %c0_23 = arith.constant 0 : index
    %c0_24 = arith.constant 0 : index
    %64 = vector.load %arg6[%c0_23, %c0_24] : memref<1x128xf32, #tpu.memory_space<vmem>>, vector<1x128xf32>
    %65 = vector.broadcast %64 : vector<1x128xf32> to vector<16x128xf32>
    %66 = arith.addf %63, %65 : vector<16x128xf32>
    %c0_25 = arith.constant 0 : index
    %c0_26 = arith.constant 0 : index
    %67 = vector.load %arg7[%c0_25, %c0_26] : memref<16x128xf32, #tpu.memory_space<vmem>>, vector<16x128xf32>
    tpu.vector_store %arg7[%c0_25, %c0_26], %66 {strides = array<i32>} : memref<16x128xf32, #tpu.memory_space<vmem>>, vector<16x128xf32>,
    return
  }
}

</mosaic_0001>

<llo_original>
// kernel: dense_featurizer_cmnist.1
$region0: #{dense_featurizer_cmnist.1}
  #allocation0 [shape = 'u32[]', space=smem, size = 0x4, offset = 0x4, fixed_abs, tag = 'smem constant byte address 0x4 - core index']
  #allocation1 [shape = 'u32[144,128]{1,0:T(1,128)}', space=vmem, size = 0x12000, scoped, tag = 'internal scratch']
  %s0 = inlined_call_operand.vmem [shape: f32[16,512], index: 0, kind: input, shape index: {}]
  %s1 = inlined_call_operand.vmem [shape: bf16[512,256], index: 1, kind: input, shape index: {}]
  %s2 = inlined_call_operand.vmem [shape: f32[2,256], index: 2, kind: input, shape index: {}]
  %s3 = inlined_call_operand.hbm [shape: bf16[256,128], index: 3, kind: input, shape index: {}]
  %s4 = inlined_call_operand.vmem [shape: f32[2,128], index: 4, kind: input, shape index: {}]
  %s5 = inlined_call_operand.vmem [shape: bf16[128,128], index: 5, kind: input, shape index: {}]
  %s6 = inlined_call_operand.vmem [shape: f32[1,128], index: 6, kind: input, shape index: {}]
  %s7 = inlined_call_operand.hbm [shape: f32[16,128], index: 7, kind: output, shape index: {}]
  %s8 = sld [smem:[#allocation0]]
  $region42: #{dense_featurizer_cmnist.1} parent=0
    _
  %s10 = ssub.s32 1, %s8
  %s11 = scalar_select 0, %s10, %s8
  $region1: #{dense_featurizer_cmnist.1} parent=0
    #allocation2 [shape = 'u8[65536]{0}', space=vmem, size = 0x10000, scoped, tag = 'input window, operand 3, single buffered']
    #allocation3 [shape = 's32[1]{0}', space=sflag, size = 0x4, scoped, tag = 'scoped memory for dense_featurizer_cmnist.1']
    #allocation4 [shape = 's32[1]{0}', space=sflag, size = 0x4, scoped, tag = 'scoped memory for dense_featurizer_cmnist.1']
    #allocation5 [shape = 'u8[8192]{0}', space=vmem, size = 0x2000, scoped, tag = 'output window, operand 0, single buffered']
    %12 = vsyncpa [#allocation3], 0
    %13 = vsyncpa [#allocation4], 0
    // Predicated region
    $region2: #{dense_featurizer_cmnist.1} parent=1 // pred_check
      _
    $region3: #{dense_featurizer_cmnist.1} parent=1 // pred_check_branch
      %15 = sbr.rel (0) target = $region5
    $region4: #{dense_featurizer_cmnist.1} parent=1 // pred_region
      _
    $region5: #{dense_featurizer_cmnist.1} parent=1 // pred_fallthru
      _
    // Predicated region
    $region6: #{dense_featurizer_cmnist.1} parent=1 // pred_check
      _
    $region7: #{dense_featurizer_cmnist.1} parent=1 // pred_check_branch
      %17 = sbr.rel (0) target = $region9
    $region8: #{dense_featurizer_cmnist.1} parent=1 // pred_region
      _
    $region9: #{dense_featurizer_cmnist.1} parent=1 // pred_fallthru
      _
    // Predicated region
    $region10: #{dense_featurizer_cmnist.1} parent=1 // pred_check
      _
    $region11: #{dense_featurizer_cmnist.1} parent=1 // pred_check_branch
      %19 = sbr.rel (0) target = $region13
    $region12: #{dense_featurizer_cmnist.1} parent=1 // pred_region
      _
    $region13: #{dense_featurizer_cmnist.1} parent=1 // pred_fallthru
      _
    // Predicated region
    $region14: #{dense_featurizer_cmnist.1} parent=1 // pred_check
      _
    $region15: #{dense_featurizer_cmnist.1} parent=1 // pred_check_branch
      %21 = sbr.rel (0) target = $region17
    $region16: #{dense_featurizer_cmnist.1} parent=1 // pred_region
      %s23 = ssub.s32 2048, 2048
      %24 = vsyncadd [#allocation3], %s23
      %s25 = sshll.u32 [#allocation2], 4
      %s26 = int_to_ptr.vmem [resolvable:$true] %s25
      %31 = dma.hbm_to_vmem [thread:$0]  %s3, 2048, %s26, [#allocation3], 64, 64, 4
    $region17: #{dense_featurizer_cmnist.1} parent=1 // pred_fallthru
      _
    // Predicated region
    $region18: #{dense_featurizer_cmnist.1} parent=1 // pred_check
      _
    $region19: #{dense_featurizer_cmnist.1} parent=1 // pred_check_branch
      %33 = sbr.rel (0) target = $region21
    $region20: #{dense_featurizer_cmnist.1} parent=1 // pred_region
      _
    $region21: #{dense_featurizer_cmnist.1} parent=1 // pred_fallthru
      _
    // Predicated region
    $region22: #{dense_featurizer_cmnist.1} parent=1 // pred_check
      _
    $region23: #{dense_featurizer_cmnist.1} parent=1 // pred_check_branch
      %35 = sbr.rel (0) target = $region25
    $region24: #{dense_featurizer_cmnist.1} parent=1 // pred_region
      _
    $region25: #{dense_featurizer_cmnist.1} parent=1 // pred_fallthru
      _
    // Predicated region
    $region26: #{dense_featurizer_cmnist.1} parent=1 // pred_check
      _
    $region27: #{dense_featurizer_cmnist.1} parent=1 // pred_check_branch
      %37 = sbr.rel (0) target = $region29
    $region28: #{dense_featurizer_cmnist.1} parent=1 // pred_region
      _
    $region29: #{dense_featurizer_cmnist.1} parent=1 // pred_fallthru
      _
    // Predicated region
    $region30: #{dense_featurizer_cmnist.1} parent=1 // pred_check
      _
    $region31: #{dense_featurizer_cmnist.1} parent=1 // pred_check_branch
      %39 = sbr.rel (0) target = $region33
    $region32: #{dense_featurizer_cmnist.1} parent=1 // pred_region
      %40 = dma.done [#allocation3], 2048
    $region33: #{dense_featurizer_cmnist.1} parent=1 // pred_fallthru
      _
    %v42 = vld [vmem:[%s0] sm:$0xff]
    %v43 = vld [vmem:[%s0 + $0x8] sm:$0xff]
    %v44 = vld [vmem:[%s0 + $0x10] sm:$0xff]
    %v45 = vld [vmem:[%s0 + $0x18] sm:$0xff]
    %v46 = vld [vmem:[%s0 + $0x20] sm:$0xff]
    %v47 = vld [vmem:[%s0 + $0x28] sm:$0xff]
    %v48 = vld [vmem:[%s0 + $0x30] sm:$0xff]
    %v49 = vld [vmem:[%s0 + $0x38] sm:$0xff]
    %v50 = vpack.c.bf16 %v46, %v42
    %v51 = vpack.c.bf16 %v47, %v43
    %v52 = vpack.c.bf16 %v48, %v44
    %v53 = vpack.c.bf16 %v49, %v45
    %v54 = vld [vmem:[%s1] sm:$0xff]
    %v55 = vld [vmem:[%s1 + $0x8] sm:$0xff]
    %v56 = vld [vmem:[%s1 + $0x10] sm:$0xff]
    %v57 = vld [vmem:[%s1 + $0x18] sm:$0xff]
    %v58 = vld [vmem:[%s1 + $0x20] sm:$0xff]
    %v59 = vld [vmem:[%s1 + $0x28] sm:$0xff]
    %v60 = vld [vmem:[%s1 + $0x30] sm:$0xff]
    %v61 = vld [vmem:[%s1 + $0x38] sm:$0xff]
    %v62 = vld [vmem:[%s1 + $0x40] sm:$0xff]
    %v63 = vld [vmem:[%s1 + $0x48] sm:$0xff]
    %v64 = vld [vmem:[%s1 + $0x50] sm:$0xff]
    %v65 = vld [vmem:[%s1 + $0x58] sm:$0xff]
    %v66 = vld [vmem:[%s1 + $0x60] sm:$0xff]
    %v67 = vld [vmem:[%s1 + $0x68] sm:$0xff]
    %v68 = vld [vmem:[%s1 + $0x70] sm:$0xff]
    %v69 = vld [vmem:[%s1 + $0x78] sm:$0xff]
    %v70 = vld [vmem:[%s1 + $0x80] sm:$0xff]
    %v71 = vld [vmem:[%s1 + $0x88] sm:$0xff]
    %v72 = vld [vmem:[%s1 + $0x90] sm:$0xff]
    %v73 = vld [vmem:[%s1 + $0x98] sm:$0xff]
    %v74 = vld [vmem:[%s1 + $0xa0] sm:$0xff]
    %v75 = vld [vmem:[%s1 + $0xa8] sm:$0xff]
    %v76 = vld [vmem:[%s1 + $0xb0] sm:$0xff]
    %v77 = vld [vmem:[%s1 + $0xb8] sm:$0xff]
    %v78 = vld [vmem:[%s1 + $0xc0] sm:$0xff]
    %v79 = vld [vmem:[%s1 + $0xc8] sm:$0xff]
    %v80 = vld [vmem:[%s1 + $0xd0] sm:$0xff]
    %v81 = vld [vmem:[%s1 + $0xd8] sm:$0xff]
    %v82 = vld [vmem:[%s1 + $0xe0] sm:$0xff]
    %v83 = vld [vmem:[%s1 + $0xe8] sm:$0xff]
    %v84 = vld [vmem:[%s1 + $0xf0] sm:$0xff]
    %v85 = vld [vmem:[%s1 + $0xf8] sm:$0xff]
    %v86 = vld [vmem:[%s1 + $0x100] sm:$0xff]
    %v87 = vld [vmem:[%s1 + $0x108] sm:$0xff]
    %v88 = vld [vmem:[%s1 + $0x110] sm:$0xff]
    %v89 = vld [vmem:[%s1 + $0x118] sm:$0xff]
    %v90 = vld [vmem:[%s1 + $0x120] sm:$0xff]
    %v91 = vld [vmem:[%s1 + $0x128] sm:$0xff]
    %v92 = vld [vmem:[%s1 + $0x130] sm:$0xff]
    %v93 = vld [vmem:[%s1 + $0x138] sm:$0xff]
    %v94 = vld [vmem:[%s1 + $0x140] sm:$0xff]
    %v95 = vld [vmem:[%s1 + $0x148] sm:$0xff]
    %v96 = vld [vmem:[%s1 + $0x150] sm:$0xff]
    %v97 = vld [vmem:[%s1 + $0x158] sm:$0xff]
    %v98 = vld [vmem:[%s1 + $0x160] sm:$0xff]
    %v99 = vld [vmem:[%s1 + $0x168] sm:$0xff]
    %v100 = vld [vmem:[%s1 + $0x170] sm:$0xff]
    %v101 = vld [vmem:[%s1 + $0x178] sm:$0xff]
    %v102 = vld [vmem:[%s1 + $0x180] sm:$0xff]
    %v103 = vld [vmem:[%s1 + $0x188] sm:$0xff]
    %v104 = vld [vmem:[%s1 + $0x190] sm:$0xff]
    %v105 = vld [vmem:[%s1 + $0x198] sm:$0xff]
    %v106 = vld [vmem:[%s1 + $0x1a0] sm:$0xff]
    %v107 = vld [vmem:[%s1 + $0x1a8] sm:$0xff]
    %v108 = vld [vmem:[%s1 + $0x1b0] sm:$0xff]
    %v109 = vld [vmem:[%s1 + $0x1b8] sm:$0xff]
    %v110 = vld [vmem:[%s1 + $0x1c0] sm:$0xff]
    %v111 = vld [vmem:[%s1 + $0x1c8] sm:$0xff]
    %v112 = vld [vmem:[%s1 + $0x1d0] sm:$0xff]
    %v113 = vld [vmem:[%s1 + $0x1d8] sm:$0xff]
    %v114 = vld [vmem:[%s1 + $0x1e0] sm:$0xff]
    %v115 = vld [vmem:[%s1 + $0x1e8] sm:$0xff]
    %v116 = vld [vmem:[%s1 + $0x1f0] sm:$0xff]
    %v117 = vld [vmem:[%s1 + $0x1f8] sm:$0xff]
    %v182 = vunpack.c.l.b16 %v54
    %v183 = vunpack.c.h.b16 %v54
    %v184 = vunpack.c.l.b16 %v55
    %v185 = vunpack.c.h.b16 %v55
    %v186 = vunpack.c.l.b16 %v56
    %v187 = vunpack.c.h.b16 %v56
    %v188 = vunpack.c.l.b16 %v57
    %v189 = vunpack.c.h.b16 %v57
    %v190 = vunpack.c.l.b16 %v58
    %v191 = vunpack.c.h.b16 %v58
    %v192 = vunpack.c.l.b16 %v59
    %v193 = vunpack.c.h.b16 %v59
    %v194 = vunpack.c.l.b16 %v60
    %v195 = vunpack.c.h.b16 %v60
    %v196 = vunpack.c.l.b16 %v61
    %v197 = vunpack.c.h.b16 %v61
    %v198 = vunpack.c.l.b16 %v62
    %v199 = vunpack.c.h.b16 %v62
    %v200 = vunpack.c.l.b16 %v63
    %v201 = vunpack.c.h.b16 %v63
    %v202 = vunpack.c.l.b16 %v64
    %v203 = vunpack.c.h.b16 %v64
    %v204 = vunpack.c.l.b16 %v65
    %v205 = vunpack.c.h.b16 %v65
    %v206 = vunpack.c.l.b16 %v66
    %v207 = vunpack.c.h.b16 %v66
    %v208 = vunpack.c.l.b16 %v67
    %v209 = vunpack.c.h.b16 %v67
    %v210 = vunpack.c.l.b16 %v68
    %v211 = vunpack.c.h.b16 %v68
    %v212 = vunpack.c.l.b16 %v69
    %v213 = vunpack.c.h.b16 %v69
    %v214 = vunpack.c.l.b16 %v70
    %v215 = vunpack.c.h.b16 %v70
    %v216 = vunpack.c.l.b16 %v71
    %v217 = vunpack.c.h.b16 %v71
    %v218 = vunpack.c.l.b16 %v72
    %v219 = vunpack.c.h.b16 %v72
    %v220 = vunpack.c.l.b16 %v73
    %v221 = vunpack.c.h.b16 %v73
    %v222 = vunpack.c.l.b16 %v74
    %v223 = vunpack.c.h.b16 %v74
    %v224 = vunpack.c.l.b16 %v75
    %v225 = vunpack.c.h.b16 %v75
    %v226 = vunpack.c.l.b16 %v76
    %v227 = vunpack.c.h.b16 %v76
    %v228 = vunpack.c.l.b16 %v77
    %v229 = vunpack.c.h.b16 %v77
    %v230 = vunpack.c.l.b16 %v78
    %v231 = vunpack.c.h.b16 %v78
    %v232 = vunpack.c.l.b16 %v79
    %v233 = vunpack.c.h.b16 %v79
    %v234 = vunpack.c.l.b16 %v80
    %v235 = vunpack.c.h.b16 %v80
    %v236 = vunpack.c.l.b16 %v81
    %v237 = vunpack.c.h.b16 %v81
    %v238 = vunpack.c.l.b16 %v82
    %v239 = vunpack.c.h.b16 %v82
    %v240 = vunpack.c.l.b16 %v83
    %v241 = vunpack.c.h.b16 %v83
    %v242 = vunpack.c.l.b16 %v84
    %v243 = vunpack.c.h.b16 %v84
    %v244 = vunpack.c.l.b16 %v85
    %v245 = vunpack.c.h.b16 %v85
    %v246 = vunpack.c.l.b16 %v86
    %v247 = vunpack.c.h.b16 %v86
    %v248 = vunpack.c.l.b16 %v87
    %v249 = vunpack.c.h.b16 %v87
    %v250 = vunpack.c.l.b16 %v88
    %v251 = vunpack.c.h.b16 %v88
    %v252 = vunpack.c.l.b16 %v89
    %v253 = vunpack.c.h.b16 %v89
    %v254 = vunpack.c.l.b16 %v90
    %v255 = vunpack.c.h.b16 %v90
    %v256 = vunpack.c.l.b16 %v91
    %v257 = vunpack.c.h.b16 %v91
    %v258 = vunpack.c.l.b16 %v92
    %v259 = vunpack.c.h.b16 %v92
    %v260 = vunpack.c.l.b16 %v93
    %v261 = vunpack.c.h.b16 %v93
    %v262 = vunpack.c.l.b16 %v94
    %v263 = vunpack.c.h.b16 %v94
    %v264 = vunpack.c.l.b16 %v95
    %v265 = vunpack.c.h.b16 %v95
    %v266 = vunpack.c.l.b16 %v96
    %v267 = vunpack.c.h.b16 %v96
    %v268 = vunpack.c.l.b16 %v97
    %v269 = vunpack.c.h.b16 %v97
    %v270 = vunpack.c.l.b16 %v98
    %v271 = vunpack.c.h.b16 %v98
    %v272 = vunpack.c.l.b16 %v99
    %v273 = vunpack.c.h.b16 %v99
    %v274 = vunpack.c.l.b16 %v100
    %v275 = vunpack.c.h.b16 %v100
    %v276 = vunpack.c.l.b16 %v101
    %v277 = vunpack.c.h.b16 %v101
    %v278 = vunpack.c.l.b16 %v102
    %v279 = vunpack.c.h.b16 %v102
    %v280 = vunpack.c.l.b16 %v103
    %v281 = vunpack.c.h.b16 %v103
    %v282 = vunpack.c.l.b16 %v104
    %v283 = vunpack.c.h.b16 %v104
    %v284 = vunpack.c.l.b16 %v105
    %v285 = vunpack.c.h.b16 %v105
    %v286 = vunpack.c.l.b16 %v106
    %v287 = vunpack.c.h.b16 %v106
    %v288 = vunpack.c.l.b16 %v107
    %v289 = vunpack.c.h.b16 %v107
    %v290 = vunpack.c.l.b16 %v108
    %v291 = vunpack.c.h.b16 %v108
    %v292 = vunpack.c.l.b16 %v109
    %v293 = vunpack.c.h.b16 %v109
    %v294 = vunpack.c.l.b16 %v110
    %v295 = vunpack.c.h.b16 %v110
    %v296 = vunpack.c.l.b16 %v111
    %v297 = vunpack.c.h.b16 %v111
    %v298 = vunpack.c.l.b16 %v112
    %v299 = vunpack.c.h.b16 %v112
    %v300 = vunpack.c.l.b16 %v113
    %v301 = vunpack.c.h.b16 %v113
    %v302 = vunpack.c.l.b16 %v114
    %v303 = vunpack.c.h.b16 %v114
    %v304 = vunpack.c.l.b16 %v115
    %v305 = vunpack.c.h.b16 %v115
    %v306 = vunpack.c.l.b16 %v116
    %v307 = vunpack.c.h.b16 %v116
    %v308 = vunpack.c.l.b16 %v117
    %v309 = vunpack.c.h.b16 %v117
    %v310 = vpack.c.b16 %v184, %v182
    %v311 = vpack.c.b16 %v185, %v183
    %v312 = vpack.c.b16 %v188, %v186
    %v313 = vpack.c.b16 %v189, %v187
    %v314 = vpack.c.b16 %v192, %v190
    %v315 = vpack.c.b16 %v193, %v191
    %v316 = vpack.c.b16 %v196, %v194
    %v317 = vpack.c.b16 %v197, %v195
    %v318 = vpack.c.b16 %v200, %v198
    %v319 = vpack.c.b16 %v201, %v199
    %v320 = vpack.c.b16 %v204, %v202
    %v321 = vpack.c.b16 %v205, %v203
    %v322 = vpack.c.b16 %v208, %v206
    %v323 = vpack.c.b16 %v209, %v207
    %v324 = vpack.c.b16 %v212, %v210
    %v325 = vpack.c.b16 %v213, %v211
    %v326 = vpack.c.b16 %v216, %v214
    %v327 = vpack.c.b16 %v217, %v215
    %v328 = vpack.c.b16 %v220, %v218
    %v329 = vpack.c.b16 %v221, %v219
    %v330 = vpack.c.b16 %v224, %v222
    %v331 = vpack.c.b16 %v225, %v223
    %v332 = vpack.c.b16 %v228, %v226
    %v333 = vpack.c.b16 %v229, %v227
    %v334 = vpack.c.b16 %v232, %v230
    %v335 = vpack.c.b16 %v233, %v231
    %v336 = vpack.c.b16 %v236, %v234
    %v337 = vpack.c.b16 %v237, %v235
    %v338 = vpack.c.b16 %v240, %v238
    %v339 = vpack.c.b16 %v241, %v239
    %v340 = vpack.c.b16 %v244, %v242
    %v341 = vpack.c.b16 %v245, %v243
    %v342 = vpack.c.b16 %v248, %v246
    %v343 = vpack.c.b16 %v249, %v247
    %v344 = vpack.c.b16 %v252, %v250
    %v345 = vpack.c.b16 %v253, %v251
    %v346 = vpack.c.b16 %v256, %v254
    %v347 = vpack.c.b16 %v257, %v255
    %v348 = vpack.c.b16 %v260, %v258
    %v349 = vpack.c.b16 %v261, %v259
    %v350 = vpack.c.b16 %v264, %v262
    %v351 = vpack.c.b16 %v265, %v263
    %v352 = vpack.c.b16 %v268, %v266
    %v353 = vpack.c.b16 %v269, %v267
    %v354 = vpack.c.b16 %v272, %v270
    %v355 = vpack.c.b16 %v273, %v271
    %v356 = vpack.c.b16 %v276, %v274
    %v357 = vpack.c.b16 %v277, %v275
    %v358 = vpack.c.b16 %v280, %v278
    %v359 = vpack.c.b16 %v281, %v279
    %v360 = vpack.c.b16 %v284, %v282
    %v361 = vpack.c.b16 %v285, %v283
    %v362 = vpack.c.b16 %v288, %v286
    %v363 = vpack.c.b16 %v289, %v287
    %v364 = vpack.c.b16 %v292, %v290
    %v365 = vpack.c.b16 %v293, %v291
    %v366 = vpack.c.b16 %v296, %v294
    %v367 = vpack.c.b16 %v297, %v295
    %v368 = vpack.c.b16 %v300, %v298
    %v369 = vpack.c.b16 %v301, %v299
    %v370 = vpack.c.b16 %v304, %v302
    %v371 = vpack.c.b16 %v305, %v303
    %v372 = vpack.c.b16 %v308, %v306
    %v373 = vpack.c.b16 %v309, %v307
    %438 = vmatprep.subr.bf16.mxu0 %v311
    %439 = vmatpush1.bf16.msra.mxu0 %v310
    %440 = vmatprep.subr.bf16.mxu0 %v313
    %441 = vmatpush1.bf16.msra.mxu0 %v312
    %442 = vmatprep.subr.bf16.mxu0 %v315
    %443 = vmatpush1.bf16.msra.mxu0 %v314
    %444 = vmatprep.subr.bf16.mxu0 %v317
    %445 = vmatpush1.bf16.msra.mxu0 %v316
    %446 = vmatprep.subr.bf16.mxu0 %v319
    %447 = vmatpush1.bf16.msra.mxu0 %v318
    %448 = vmatprep.subr.bf16.mxu0 %v321
    %449 = vmatpush1.bf16.msra.mxu0 %v320
    %450 = vmatprep.subr.bf16.mxu0 %v323
    %451 = vmatpush1.bf16.msra.mxu0 %v322
    %452 = vmatprep.subr.bf16.mxu0 %v325
    %453 = vmatpush1.bf16.msra.mxu0 %v324
    %454 = vmatprep.subr.bf16.mxu0 %v327
    %455 = vmatpush1.bf16.msra.mxu0 %v326
    %456 = vmatprep.subr.bf16.mxu0 %v329
    %457 = vmatpush1.bf16.msra.mxu0 %v328
    %458 = vmatprep.subr.bf16.mxu0 %v331
    %459 = vmatpush1.bf16.msra.mxu0 %v330
    %460 = vmatprep.subr.bf16.mxu0 %v333
    %461 = vmatpush1.bf16.msra.mxu0 %v332
    %462 = vmatprep.subr.bf16.mxu0 %v335
    %463 = vmatpush1.bf16.msra.mxu0 %v334
    %464 = vmatprep.subr.bf16.mxu0 %v337
    %465 = vmatpush1.bf16.msra.mxu0 %v336
    %466 = vmatprep.subr.bf16.mxu0 %v339
    %467 = vmatpush1.bf16.msra.mxu0 %v338
    %468 = vmatprep.subr.bf16.mxu0 %v341
    %469 = vmatpush1.bf16.msra.mxu0 %v340
    %470 = vmatprep.mubr.bf16.mxu0 %v51
    %471 = vmatmul.mubr.bf16.gmra.mrb[0].mxu0 %v50
    %v472 = vpop.f32.mrb[0].mxu0
    %v473 = vadd.f32 0.0, %v472
    %v474 = vpop.f32.mrb[0].mxu0
    %v475 = vadd.f32 0.0, %v474
    %v476 = vpop.f32.mrb[0].mxu0
    %v477 = vadd.f32 0.0, %v476
    %v478 = vpop.f32.mrb[0].mxu0
    %v479 = vadd.f32 0.0, %v478
    %480 = vdwg.mxu0
    %481 = vmatprep.subr.bf16.mxu0 %v343
    %482 = vmatpush1.bf16.msra.mxu0 %v342
    %483 = vmatprep.subr.bf16.mxu0 %v345
    %484 = vmatpush1.bf16.msra.mxu0 %v344
    %485 = vmatprep.subr.bf16.mxu0 %v347
    %486 = vmatpush1.bf16.msra.mxu0 %v346
    %487 = vmatprep.subr.bf16.mxu0 %v349
    %488 = vmatpush1.bf16.msra.mxu0 %v348
    %489 = vmatprep.subr.bf16.mxu0 %v351
    %490 = vmatpush1.bf16.msra.mxu0 %v350
    %491 = vmatprep.subr.bf16.mxu0 %v353
    %492 = vmatpush1.bf16.msra.mxu0 %v352
    %493 = vmatprep.subr.bf16.mxu0 %v355
    %494 = vmatpush1.bf16.msra.mxu0 %v354
    %495 = vmatprep.subr.bf16.mxu0 %v357
    %496 = vmatpush1.bf16.msra.mxu0 %v356
    %497 = vmatprep.subr.bf16.mxu0 %v359
    %498 = vmatpush1.bf16.msra.mxu0 %v358
    %499 = vmatprep.subr.bf16.mxu0 %v361
    %500 = vmatpush1.bf16.msra.mxu0 %v360
    %501 = vmatprep.subr.bf16.mxu0 %v363
    %502 = vmatpush1.bf16.msra.mxu0 %v362
    %503 = vmatprep.subr.bf16.mxu0 %v365
    %504 = vmatpush1.bf16.msra.mxu0 %v364
    %505 = vmatprep.subr.bf16.mxu0 %v367
    %506 = vmatpush1.bf16.msra.mxu0 %v366
    %507 = vmatprep.subr.bf16.mxu0 %v369
    %508 = vmatpush1.bf16.msra.mxu0 %v368
    %509 = vmatprep.subr.bf16.mxu0 %v371
    %510 = vmatpush1.bf16.msra.mxu0 %v370
    %511 = vmatprep.subr.bf16.mxu0 %v373
    %512 = vmatpush1.bf16.msra.mxu0 %v372
    %513 = vmatprep.mubr.bf16.mxu0 %v53
    %514 = vmatmul.mubr.bf16.gmra.mrb[0].mxu0 %v52
    %v515 = vpop.f32.mrb[0].mxu0
    %v516 = vadd.f32 %v473, %v515
    %v517 = vpop.f32.mrb[0].mxu0
    %v518 = vadd.f32 %v475, %v517
    %v519 = vpop.f32.mrb[0].mxu0
    %v520 = vadd.f32 %v477, %v519
    %v521 = vpop.f32.mrb[0].mxu0
    %v522 = vadd.f32 %v479, %v521
    %523 = vdwg.mxu0
    %v524 = vld [vmem:[%s2] sm:$0xf]
    %v525 = vmul.f32 %v516, %v516
    %v526 = vmul.f32 %v518, %v518
    %v527 = vmul.f32 %v520, %v520
    %v528 = vmul.f32 %v522, %v522
    %v529 = vadd.f32 %v516, %v520
    %v530 = vrot.slane %v529, 4
    %v531 = vadd.f32 %v529, %v530
    %v532 = vrot.slane %v531, 2
    %v533 = vadd.f32 %v531, %v532
    %v534 = vrot.slane %v533, 1
    %v535 = vadd.f32 %v533, %v534
    %v536 = vadd.f32 %v518, %v522
    %v537 = vrot.slane %v536, 4
    %v538 = vadd.f32 %v536, %v537
    %v539 = vrot.slane %v538, 2
    %v540 = vadd.f32 %v538, %v539
    %v541 = vrot.slane %v540, 1
    %v542 = vadd.f32 %v540, %v541
    %v543 = vadd.f32 %v525, %v527
    %v544 = vrot.slane %v543, 4
    %v545 = vadd.f32 %v543, %v544
    %v546 = vrot.slane %v545, 2
    %v547 = vadd.f32 %v545, %v546
    %v548 = vrot.slane %v547, 1
    %v549 = vadd.f32 %v547, %v548
    %v550 = vadd.f32 %v526, %v528
    %v551 = vrot.slane %v550, 4
    %v552 = vadd.f32 %v550, %v551
    %v553 = vrot.slane %v552, 2
    %v554 = vadd.f32 %v552, %v553
    %v555 = vrot.slane %v554, 1
    %v556 = vadd.f32 %v554, %v555
    %v557 = vmul.f32 %v535, 0.0625
    %v558 = vmul.f32 %v542, 0.0625
    %v559 = vmul.f32 %v549, 0.0625
    %v560 = vmul.f32 %v556, 0.0625
    %v561 = vmul.f32 %v557, %v557
    %v562 = vmul.f32 %v558, %v558
    %v563 = vsub.f32 %v559, %v561
    %v564 = vsub.f32 %v560, %v562
    %v565 = vadd.f32 %v563, 1e-05
    %v566 = vadd.f32 %v564, 1e-05
    %v567 = vrsqrt.pop %v565
    %v568 = vrsqrt.pop %v566
    %v571 = vcombine.low %v567, %v568
    %v573 = vunpack.c.l.s4 1983009808
    %v574 = vunpack.c.0.s8 %v573
    %v575 = vlaneseq
    %v576 = vshrl.u32 %v575, 7
    %v577 = vsub.s32 %v574, %v576
    %v578 = vrot.slane %v571, %v577
    %v580 = vmul.f32 %v524, %v578
    %v582 = vlaneseq
    %v583 = vshrl.u32 %v582, 7
    %v584 = vsub.s32 0, %v583
    %v585 = vrot.slane %v580, %v584
    %v586 = vlaneseq
    %v587 = vshrl.u32 %v586, 7
    %v588 = vsub.s32 2, %v587
    %v589 = vrot.slane %v580, %v588
    %v592 = vmul.f32 %v557, %v585
    %v593 = vmul.f32 %v558, %v589
    %v596 = vcombine.low %v592, %v593
    %v598 = vunpack.c.l.s4 1983009808
    %v599 = vunpack.c.0.s8 %v598
    %v600 = vlaneseq
    %v601 = vshrl.u32 %v600, 7
    %v602 = vsub.s32 %v599, %v601
    %v603 = vrot.slane %v596, %v602
    %v604 = vrot.slane %v603, 7
    %v606 = vsub.f32 %v524, %v604
    %v607 = vlaneseq
    %v608 = vshrl.u32 %v607, 7
    %v609 = vsub.s32 0, %v608
    %v610 = vrot.slane %v585, %v609
    %v611 = vlaneseq
    %v612 = vshrl.u32 %v611, 7
    %v613 = vsub.s32 0, %v612
    %v614 = vrot.slane %v589, %v613
    %v615 = vmul.f32 %v516, %v610
    %v616 = vmul.f32 %v518, %v614
    %v617 = vmul.f32 %v520, %v610
    %v618 = vmul.f32 %v522, %v614
    %v620 = vlaneseq
    %v621 = vshrl.u32 %v620, 7
    %v622 = vsub.s32 1, %v621
    %v623 = vrot.slane %v606, %v622
    %v624 = vlaneseq
    %v625 = vshrl.u32 %v624, 7
    %v626 = vsub.s32 3, %v625
    %v627 = vrot.slane %v606, %v626
    %v630 = vlaneseq
    %v631 = vshrl.u32 %v630, 7
    %v632 = vsub.s32 1, %v631
    %v633 = vrot.slane %v623, %v632
    %v634 = vlaneseq
    %v635 = vshrl.u32 %v634, 7
    %v636 = vsub.s32 1, %v635
    %v637 = vrot.slane %v627, %v636
    %v638 = vadd.f32 %v615, %v633
    %v639 = vadd.f32 %v616, %v637
    %v640 = vadd.f32 %v617, %v633
    %v641 = vadd.f32 %v618, %v637
    %v642 = vmax.f32 %v638, 0.0
    %v643 = vmax.f32 %v639, 0.0
    %v644 = vmax.f32 %v640, 0.0
    %v645 = vmax.f32 %v641, 0.0
    %v646 = vpack.c.bf16 %v644, %v642
    %v647 = vpack.c.bf16 %v645, %v643
    %v648 = vld [vmem:[#allocation2] sm:$0xf]
    %v649 = vld [vmem:[#allocation2 + $0x4] sm:$0xf]
    %v650 = vld [vmem:[#allocation2 + $0x8] sm:$0xf]
    %v651 = vld [vmem:[#allocation2 + $0xc] sm:$0xf]
    %v652 = vld [vmem:[#allocation2 + $0x10] sm:$0xf]
    %v653 = vld [vmem:[#allocation2 + $0x14] sm:$0xf]
    %v654 = vld [vmem:[#allocation2 + $0x18] sm:$0xf]
    %v655 = vld [vmem:[#allocation2 + $0x1c] sm:$0xf]
    %v656 = vld [vmem:[#allocation2 + $0x20] sm:$0xf]
    %v657 = vld [vmem:[#allocation2 + $0x24] sm:$0xf]
    %v658 = vld [vmem:[#allocation2 + $0x28] sm:$0xf]
    %v659 = vld [vmem:[#allocation2 + $0x2c] sm:$0xf]
    %v660 = vld [vmem:[#allocation2 + $0x30] sm:$0xf]
    %v661 = vld [vmem:[#allocation2 + $0x34] sm:$0xf]
    %v662 = vld [vmem:[#allocation2 + $0x38] sm:$0xf]
    %v663 = vld [vmem:[#allocation2 + $0x3c] sm:$0xf]
    %v664 = vld [vmem:[#allocation2 + $0x40] sm:$0xf]
    %v665 = vld [vmem:[#allocation2 + $0x44] sm:$0xf]
    %v666 = vld [vmem:[#allocation2 + $0x48] sm:$0xf]
    %v667 = vld [vmem:[#allocation2 + $0x4c] sm:$0xf]
    %v668 = vld [vmem:[#allocation2 + $0x50] sm:$0xf]
    %v669 = vld [vmem:[#allocation2 + $0x54] sm:$0xf]
    %v670 = vld [vmem:[#allocation2 + $0x58] sm:$0xf]
    %v671 = vld [vmem:[#allocation2 + $0x5c] sm:$0xf]
    %v672 = vld [vmem:[#allocation2 + $0x60] sm:$0xf]
    %v673 = vld [vmem:[#allocation2 + $0x64] sm:$0xf]
    %v674 = vld [vmem:[#allocation2 + $0x68] sm:$0xf]
    %v675 = vld [vmem:[#allocation2 + $0x6c] sm:$0xf]
    %v676 = vld [vmem:[#allocation2 + $0x70] sm:$0xf]
    %v677 = vld [vmem:[#allocation2 + $0x74] sm:$0xf]
    %v678 = vld [vmem:[#allocation2 + $0x78] sm:$0xf]
    %v679 = vld [vmem:[#allocation2 + $0x7c] sm:$0xf]
    %v712 = vunpack.c.l.b16 %v648
    %v713 = vunpack.c.l.b16 %v649
    %v714 = vunpack.c.l.b16 %v650
    %v715 = vunpack.c.l.b16 %v651
    %v716 = vunpack.c.l.b16 %v652
    %v717 = vunpack.c.l.b16 %v653
    %v718 = vunpack.c.l.b16 %v654
    %v719 = vunpack.c.l.b16 %v655
    %v720 = vunpack.c.l.b16 %v656
    %v721 = vunpack.c.l.b16 %v657
    %v722 = vunpack.c.l.b16 %v658
    %v723 = vunpack.c.l.b16 %v659
    %v724 = vunpack.c.l.b16 %v660
    %v725 = vunpack.c.l.b16 %v661
    %v726 = vunpack.c.l.b16 %v662
    %v727 = vunpack.c.l.b16 %v663
    %v728 = vunpack.c.l.b16 %v664
    %v729 = vunpack.c.l.b16 %v665
    %v730 = vunpack.c.l.b16 %v666
    %v731 = vunpack.c.l.b16 %v667
    %v732 = vunpack.c.l.b16 %v668
    %v733 = vunpack.c.l.b16 %v669
    %v734 = vunpack.c.l.b16 %v670
    %v735 = vunpack.c.l.b16 %v671
    %v736 = vunpack.c.l.b16 %v672
    %v737 = vunpack.c.l.b16 %v673
    %v738 = vunpack.c.l.b16 %v674
    %v739 = vunpack.c.l.b16 %v675
    %v740 = vunpack.c.l.b16 %v676
    %v741 = vunpack.c.l.b16 %v677
    %v742 = vunpack.c.l.b16 %v678
    %v743 = vunpack.c.l.b16 %v679
    %v744 = vpack.c.b16 %v713, %v712
    %v745 = vpack.c.b16 %v715, %v714
    %v746 = vpack.c.b16 %v717, %v716
    %v747 = vpack.c.b16 %v719, %v718
    %v748 = vpack.c.b16 %v721, %v720
    %v749 = vpack.c.b16 %v723, %v722
    %v750 = vpack.c.b16 %v725, %v724
    %v751 = vpack.c.b16 %v727, %v726
    %v752 = vpack.c.b16 %v729, %v728
    %v753 = vpack.c.b16 %v731, %v730
    %v754 = vpack.c.b16 %v733, %v732
    %v755 = vpack.c.b16 %v735, %v734
    %v756 = vpack.c.b16 %v737, %v736
    %v757 = vpack.c.b16 %v739, %v738
    %v758 = vpack.c.b16 %v741, %v740
    %v759 = vpack.c.b16 %v743, %v742
    %776 = vmatprep.subr.bf16.mxu0 0
    %777 = vmatpush1.bf16.msra.mxu0 %v744
    %778 = vmatprep.subr.bf16.mxu0 0
    %779 = vmatpush1.bf16.msra.mxu0 %v745
    %780 = vmatprep.subr.bf16.mxu0 0
    %781 = vmatpush1.bf16.msra.mxu0 %v746
    %782 = vmatprep.subr.bf16.mxu0 0
    %783 = vmatpush1.bf16.msra.mxu0 %v747
    %784 = vmatprep.subr.bf16.mxu0 0
    %785 = vmatpush1.bf16.msra.mxu0 %v748
    %786 = vmatprep.subr.bf16.mxu0 0
    %787 = vmatpush1.bf16.msra.mxu0 %v749
    %788 = vmatprep.subr.bf16.mxu0 0
    %789 = vmatpush1.bf16.msra.mxu0 %v750
    %790 = vmatprep.subr.bf16.mxu0 0
    %791 = vmatpush1.bf16.msra.mxu0 %v751
    %792 = vmatprep.subr.bf16.mxu0 0
    %793 = vmatpush1.bf16.msra.mxu0 %v752
    %794 = vmatprep.subr.bf16.mxu0 0
    %795 = vmatpush1.bf16.msra.mxu0 %v753
    %796 = vmatprep.subr.bf16.mxu0 0
    %797 = vmatpush1.bf16.msra.mxu0 %v754
    %798 = vmatprep.subr.bf16.mxu0 0
    %799 = vmatpush1.bf16.msra.mxu0 %v755
    %800 = vmatprep.subr.bf16.mxu0 0
    %801 = vmatpush1.bf16.msra.mxu0 %v756
    %802 = vmatprep.subr.bf16.mxu0 0
    %803 = vmatpush1.bf16.msra.mxu0 %v757
    %804 = vmatprep.subr.bf16.mxu0 0
    %805 = vmatpush1.bf16.msra.mxu0 %v758
    %806 = vmatprep.subr.bf16.mxu0 0
    %807 = vmatpush1.bf16.msra.mxu0 %v759
    %808 = vmatprep.mubr.bf16.mxu0 %v647
    %809 = vmatmul.mubr.bf16.gmra.mrb[0].mxu0 %v646
    %v810 = vpop.f32.mrb[0].mxu0
    %v811 = vadd.f32 0.0, %v810
    %v812 = vpop.f32.mrb[0].mxu0
    %v813 = vpop.f32.mrb[0].mxu0
    %v814 = vadd.f32 0.0, %v813
    %v815 = vpop.f32.mrb[0].mxu0
    %816 = vdwg.mxu0
    %v817 = vld [vmem:[%s4] sm:$0x3]
    %v818 = vmul.f32 %v811, %v811
    %v819 = vmul.f32 %v814, %v814
    %v820 = vadd.f32 %v811, %v814
    %v821 = vrot.slane %v820, 4
    %v822 = vadd.f32 %v820, %v821
    %v823 = vrot.slane %v822, 2
    %v824 = vadd.f32 %v822, %v823
    %v825 = vrot.slane %v824, 1
    %v826 = vadd.f32 %v824, %v825
    %v827 = vadd.f32 %v818, %v819
    %v828 = vrot.slane %v827, 4
    %v829 = vadd.f32 %v827, %v828
    %v830 = vrot.slane %v829, 2
    %v831 = vadd.f32 %v829, %v830
    %v832 = vrot.slane %v831, 1
    %v833 = vadd.f32 %v831, %v832
    %v834 = vmul.f32 %v826, 0.0625
    %v835 = vmul.f32 %v833, 0.0625
    %v836 = vmul.f32 %v834, %v834
    %v837 = vsub.f32 %v835, %v836
    %v838 = vadd.f32 %v837, 1e-05
    %v839 = vrsqrt.pop %v838
    %v840 = vmul.f32 %v817, %v839
    %v841 = vmul.f32 %v834, %v840
    %v843 = vrot.slane %v841, 7
    %v845 = vsub.f32 %v817, %v843
    %v846 = vlaneseq
    %v847 = vshrl.u32 %v846, 7
    %v848 = vsub.s32 0, %v847
    %v849 = vrot.slane %v840, %v848
    %v850 = vmul.f32 %v811, %v849
    %v851 = vmul.f32 %v814, %v849
    %v852 = vlaneseq
    %v853 = vshrl.u32 %v852, 7
    %v854 = vsub.s32 1, %v853
    %v855 = vrot.slane %v845, %v854
    %v856 = vadd.f32 %v850, %v855
    %v857 = vadd.f32 %v851, %v855
    %v858 = vmax.f32 %v856, 0.0
    %v859 = vmax.f32 %v857, 0.0
    %v860 = vpack.c.bf16 %v859, %v858
    %v861 = vld [vmem:[%s5] sm:$0xf]
    %v862 = vld [vmem:[%s5 + $0x4] sm:$0xf]
    %v863 = vld [vmem:[%s5 + $0x8] sm:$0xf]
    %v864 = vld [vmem:[%s5 + $0xc] sm:$0xf]
    %v865 = vld [vmem:[%s5 + $0x10] sm:$0xf]
    %v866 = vld [vmem:[%s5 + $0x14] sm:$0xf]
    %v867 = vld [vmem:[%s5 + $0x18] sm:$0xf]
    %v868 = vld [vmem:[%s5 + $0x1c] sm:$0xf]
    %v869 = vld [vmem:[%s5 + $0x20] sm:$0xf]
    %v870 = vld [vmem:[%s5 + $0x24] sm:$0xf]
    %v871 = vld [vmem:[%s5 + $0x28] sm:$0xf]
    %v872 = vld [vmem:[%s5 + $0x2c] sm:$0xf]
    %v873 = vld [vmem:[%s5 + $0x30] sm:$0xf]
    %v874 = vld [vmem:[%s5 + $0x34] sm:$0xf]
    %v875 = vld [vmem:[%s5 + $0x38] sm:$0xf]
    %v876 = vld [vmem:[%s5 + $0x3c] sm:$0xf]
    %v877 = vld [vmem:[%s6] sm:$0x1]
    %v879 = vlaneseq
    %v880 = vshrl.u32 %v879, 7
    %v881 = vsub.s32 0, %v880
    %v882 = vrot.slane %v877, %v881
    %v900 = vunpack.c.l.b16 %v861
    %v901 = vunpack.c.l.b16 %v862
    %v902 = vunpack.c.l.b16 %v863
    %v903 = vunpack.c.l.b16 %v864
    %v904 = vunpack.c.l.b16 %v865
    %v905 = vunpack.c.l.b16 %v866
    %v906 = vunpack.c.l.b16 %v867
    %v907 = vunpack.c.l.b16 %v868
    %v908 = vunpack.c.l.b16 %v869
    %v909 = vunpack.c.l.b16 %v870
    %v910 = vunpack.c.l.b16 %v871
    %v911 = vunpack.c.l.b16 %v872
    %v912 = vunpack.c.l.b16 %v873
    %v913 = vunpack.c.l.b16 %v874
    %v914 = vunpack.c.l.b16 %v875
    %v915 = vunpack.c.l.b16 %v876
    %v916 = vpack.c.b16 %v901, %v900
    %v917 = vpack.c.b16 %v903, %v902
    %v918 = vpack.c.b16 %v905, %v904
    %v919 = vpack.c.b16 %v907, %v906
    %v920 = vpack.c.b16 %v909, %v908
    %v921 = vpack.c.b16 %v911, %v910
    %v922 = vpack.c.b16 %v913, %v912
    %v923 = vpack.c.b16 %v915, %v914
    %932 = vmatprep.subr.bf16.mxu0 0
    %933 = vmatpush1.bf16.msra.mxu0 %v916
    %934 = vmatprep.subr.bf16.mxu0 0
    %935 = vmatpush1.bf16.msra.mxu0 %v917
    %936 = vmatprep.subr.bf16.mxu0 0
    %937 = vmatpush1.bf16.msra.mxu0 %v918
    %938 = vmatprep.subr.bf16.mxu0 0
    %939 = vmatpush1.bf16.msra.mxu0 %v919
    %940 = vmatprep.subr.bf16.mxu0 0
    %941 = vmatpush1.bf16.msra.mxu0 %v920
    %942 = vmatprep.subr.bf16.mxu0 0
    %943 = vmatpush1.bf16.msra.mxu0 %v921
    %944 = vmatprep.subr.bf16.mxu0 0
    %945 = vmatpush1.bf16.msra.mxu0 %v922
    %946 = vmatprep.subr.bf16.mxu0 0
    %947 = vmatpush1.bf16.msra.mxu0 %v923
    %948 = vmatprep.subr.bf16.mxu0 0
    %949 = vmatpush1.bf16.msra.mxu0 0
    %950 = vmatprep.subr.bf16.mxu0 0
    %951 = vmatpush1.bf16.msra.mxu0 0
    %952 = vmatprep.subr.bf16.mxu0 0
    %953 = vmatpush1.bf16.msra.mxu0 0
    %954 = vmatprep.subr.bf16.mxu0 0
    %955 = vmatpush1.bf16.msra.mxu0 0
    %956 = vmatprep.subr.bf16.mxu0 0
    %957 = vmatpush1.bf16.msra.mxu0 0
    %958 = vmatprep.subr.bf16.mxu0 0
    %959 = vmatpush1.bf16.msra.mxu0 0
    %960 = vmatprep.subr.bf16.mxu0 0
    %961 = vmatpush1.bf16.msra.mxu0 0
    %962 = vmatprep.subr.bf16.mxu0 0
    %963 = vmatpush1.bf16.msra.mxu0 0
    %964 = vmatprep.mubr.bf16.mxu0 0
    %965 = vmatmul.mubr.bf16.gmra.mrb[0].mxu0 %v860
    %v966 = vpop.f32.mrb[0].mxu0
    %v967 = vadd.f32 %v882, %v966
    %v968 = vpop.f32.mrb[0].mxu0
    %v969 = vpop.f32.mrb[0].mxu0
    %v970 = vadd.f32 %v882, %v969
    %v971 = vpop.f32.mrb[0].mxu0
    %972 = vdwg.mxu0
    %973 = vst [vmem:[#allocation5] sm:$0xff] %v967
    %974 = vst [vmem:[#allocation5 + $0x8] sm:$0xff] %v970
    // Predicated region
    $region34: #{dense_featurizer_cmnist.1} parent=1 // pred_check
      _
    $region35: #{dense_featurizer_cmnist.1} parent=1 // pred_check_branch
      %976 = sbr.rel (0) target = $region37
    $region36: #{dense_featurizer_cmnist.1} parent=1 // pred_region
      %s978 = ssub.s32 256, 256
      %979 = vsyncadd [#allocation4], %s978
      %s980 = sshll.u32 [#allocation5], 4
      %s981 = int_to_ptr.vmem [resolvable:$true] %s980
      %986 = dma.vmem_to_hbm [thread:$0]  %s981, 256, %s7, [#allocation4], 128, 128, 8
    $region37: #{dense_featurizer_cmnist.1} parent=1 // pred_fallthru
      _
    // Predicated region
    $region38: #{dense_featurizer_cmnist.1} parent=1 // pred_check
      _
    $region39: #{dense_featurizer_cmnist.1} parent=1 // pred_check_branch
      %988 = sbr.rel (0) target = $region41
    $region40: #{dense_featurizer_cmnist.1} parent=1 // pred_region
      %989 = dma.done [#allocation4], 256
    $region41: #{dense_featurizer_cmnist.1} parent=1 // pred_fallthru
      _
    %990 = vsyncpa [#allocation3], 1
    %991 = vsyncpa [#allocation4], 1

</llo_original>
